<compile_context>
chip_gen: v7x
topology: tpu7x:2x2x1
jax: 0.10.0
libtpu: 0.0.40
codegen_flags: <defaults>
</compile_context>

<pallas_src>
import functools

import jax
import jax.numpy as jnp
from jax.experimental import pallas as pl
from jax.experimental.pallas import tpu as pltpu

HIDDEN_SIZE = 32


def _round_up(x, m):
    return (x + m - 1) // m * m


def critic_kernel(n_actions,
                  state_ref, action_ref,
                  w1_ref, b1_ref,
                  w2_ref, b2_ref,
                  w3o_ref, w3a_ref, b3_ref,
                  w4r_ref, b4_ref,
                  out_ref):
    state = state_ref[...].astype(jnp.float32)    # state.float()
    action = action_ref[...].astype(jnp.float32)

    # obs_net: Linear -> ReLU -> Linear -> ReLU   (MXU, K<=32, N=32)
    h1 = jnp.dot(state, w1_ref[...], preferred_element_type=jnp.float32) + b1_ref[...]
    h1 = jnp.maximum(h1, 0.0)
    obs = jnp.dot(h1, w2_ref[...], preferred_element_type=jnp.float32) + b2_ref[...]
    obs = jnp.maximum(obs, 0.0)

    # Action branch of Linear(HIDDEN + n_actions, HIDDEN):
    # K = n_actions (tiny) -> unrolled broadcast multiply-adds on the VPU so it
    # overlaps with the obs MXU matmul instead of serializing through the MRF.
    act_contrib = action[:, 0:1] * w3a_ref[0:1, :]
    for k in range(1, n_actions):
        act_contrib = act_contrib + action[:, k:k + 1] * w3a_ref[k:k + 1, :]

    h3 = (jnp.dot(obs, w3o_ref[...], preferred_element_type=jnp.float32)
          + act_contrib
          + b3_ref[...])
    h3 = jnp.maximum(h3, 0.0)

    # Final Linear(HIDDEN, 1): VPU multiply + XLU lane-reduce (no 1-column MXU
    # matmul).  b4 is a scalar read from SMEM.
    value = jnp.sum(h3 * w4r_ref[...], axis=-1, keepdims=True) + b4_ref[0, 0]
    out_ref[...] = value.astype(out_ref.dtype)


def critic_net_forward(state, action, params, *, block_batch=256):
    """state: [B, obs_size], action: [B, n_actions] -> value: [B, 1] (f32)."""
    (w1, b1, w2, b2, w3o, w3a, b3, w4r, b4) = params
    batch, obs_size = state.shape
    n_actions = action.shape[1]
    hidden = w1.shape[1]

    # Batch tile: multiple of 8 sublanes, capped at block_batch; pad the batch
    # so it divides evenly (padded rows are sliced off after the call).
    tb = min(block_batch, _round_up(batch, 8))
    padded = _round_up(batch, tb)
    if padded != batch:
        state = jnp.pad(state, ((0, padded - batch), (0, 0)))
        action = jnp.pad(action, ((0, padded - batch), (0, 0)))
    grid = (padded // tb,)

    def batched(shape2):
        # Tiled along the batch axis, one tile per grid step.
        return pl.BlockSpec(shape2, lambda i: (i, 0))

    def resident(shape2):
        # Same block every grid step -> stays VMEM-resident, DMA'd once.
        return pl.BlockSpec(shape2, lambda i: (0, 0))

    in_specs = [
        batched((tb, obs_size)),                               # state
        batched((tb, n_actions)),                              # action
        resident((obs_size, hidden)),                          # w1
        resident((1, hidden)),                                 # b1
        resident((hidden, hidden)),                            # w2
        resident((1, hidden)),                                 # b2
        resident((hidden, hidden)),                            # w3 (obs part)
        resident((n_actions, hidden)),                         # w3 (action part)
        resident((1, hidden)),                                 # b3
        resident((1, hidden)),                                 # w4 as a row
        pl.BlockSpec(memory_space=pltpu.MemorySpace.SMEM),     # b4 scalar
    ]
    out_spec = batched((tb, 1))

    out = pl.pallas_call(
        functools.partial(critic_kernel, n_actions),
        out_shape=jax.ShapeDtypeStruct((padded, 1), jnp.float32),
        grid=grid,
        in_specs=in_specs,
        out_specs=out_spec,
        compiler_params=pltpu.CompilerParams(
            dimension_semantics=("parallel",),   # megacore sharding on v7x
        ),
    )(state, action, w1, b1, w2, b2, w3o, w3a, b3, w4r, b4)

    return out[:batch]


def init_params(key, obs_size, n_actions, hidden=HIDDEN_SIZE):
    ks = jax.random.split(key, 8)
    scale = 0.1
    # Weights as [in, out]; biases as [1, out].
    w1 = scale * jax.random.normal(ks[0], (obs_size, hidden), jnp.float32)
    b1 = scale * jax.random.normal(ks[1], (1, hidden), jnp.float32)
    w2 = scale * jax.random.normal(ks[2], (hidden, hidden), jnp.float32)
    b2 = scale * jax.random.normal(ks[3], (1, hidden), jnp.float32)
    # Linear(hidden + n_actions, hidden) split into obs part and action part.
    w3_full = scale * jax.random.normal(ks[4], (hidden + n_actions, hidden), jnp.float32)
    w3o = w3_full[:hidden, :]
    w3a = w3_full[hidden:, :]
    b3 = scale * jax.random.normal(ks[5], (1, hidden), jnp.float32)
    # Final Linear(hidden, 1) weight stored as a (1, hidden) row.
    w4r = scale * jax.random.normal(ks[6], (1, hidden), jnp.float32)
    b4 = scale * jax.random.normal(ks[7], (1, 1), jnp.float32)
    return (w1, b1, w2, b2, w3o, w3a, b3, w4r, b4)


def reference_forward(state, action, params):
    (w1, b1, w2, b2, w3o, w3a, b3, w4r, b4) = params
    state = state.astype(jnp.float32)
    action = action.astype(jnp.float32)
    h1 = jnp.maximum(state @ w1 + b1, 0.0)
    obs = jnp.maximum(h1 @ w2 + b2, 0.0)
    cat = jnp.concatenate([obs, action], axis=1)
    w3 = jnp.concatenate([w3o, w3a], axis=0)
    h3 = jnp.maximum(cat @ w3 + b3, 0.0)
    return h3 @ w4r.T + b4


if __name__ == "__main__":
    obs_size = 16
    n_actions = 4
    batch = 8

    key = jax.random.PRNGKey(0)
    k_state, k_action, k_params, k_state2, k_action2 = jax.random.split(key, 5)

    params = init_params(k_params, obs_size, n_actions)

    # Small single-tile case.
    state = jax.random.normal(k_state, (batch, obs_size), jnp.float32)
    action = jax.random.normal(k_action, (batch, n_actions), jnp.float32)
    value = critic_net_forward(state, action, params)
    value = jax.block_until_ready(value)
    ref = reference_forward(state, action, params)
    assert value.shape == (batch, 1)
    assert jnp.allclose(value, ref, atol=1e-5, rtol=1e-5)

    # Multi-tile case: exercises the batch grid, resident weights, and the
    # remainder padding/slicing path.
    batch2 = 300
    state2 = jax.random.normal(k_state2, (batch2, obs_size), jnp.float32)
    action2 = jax.random.normal(k_action2, (batch2, n_actions), jnp.float32)
    value2 = critic_net_forward(state2, action2, params, block_batch=128)
    value2 = jax.block_until_ready(value2)
    ref2 = reference_forward(state2, action2, params)
    assert value2.shape == (batch2, 1)
    assert jnp.allclose(value2, ref2, atol=1e-5, rtol=1e-5)

    print("KERNEL_OK")
</pallas_src>

<mosaic_0001>
module attributes {stable_mosaic.version = 11 : i64} {
  func.func @critic_kernel(%arg0: i32, %arg1: memref<8x16xf32, #tpu.memory_space<vmem>>, %arg2: memref<8x4xf32, #tpu.memory_space<vmem>>, %arg3: memref<16x32xf32, #tpu.memory_space<vmem>>, %arg4: memref<1x32xf32, #tpu.memory_space<vmem>>, %arg5: memref<32x32xf32, #tpu.memory_space<vmem>>, %arg6: memref<1x32xf32, #tpu.memory_space<vmem>>, %arg7: memref<32x32xf32, #tpu.memory_space<vmem>>, %arg8: memref<4x32xf32, #tpu.memory_space<vmem>>, %arg9: memref<1x32xf32, #tpu.memory_space<vmem>>, %arg10: memref<1x32xf32, #tpu.memory_space<vmem>>, %arg11: memref<1x1xf32, #tpu.memory_space<smem>>, %arg12: memref<8x1xf32, #tpu.memory_space<vmem>>) attributes {dimension_semantics = [#tpu.dimension_semantics<parallel>], iteration_bounds = array<i64: 1>, scalar_prefetch = 0 : i64, scratch_operands = 0 : i64, tpu.core_type = #tpu.core_type<tc>, window_params = [{transform_indices = @transform_0, window_bounds = array<i64: 8, 16>}, {transform_indices = @transform_1, window_bounds = array<i64: 8, 4>}, {pipeline_mode = #tpu.pipeline_mode<synchronous>, transform_indices = @transform_2, window_bounds = array<i64: 16, 32>}, {pipeline_mode = #tpu.pipeline_mode<synchronous>, transform_indices = @transform_3, window_bounds = array<i64: 1, 32>}, {pipeline_mode = #tpu.pipeline_mode<synchronous>, transform_indices = @transform_4, window_bounds = array<i64: 32, 32>}, {pipeline_mode = #tpu.pipeline_mode<synchronous>, transform_indices = @transform_5, window_bounds = array<i64: 1, 32>}, {pipeline_mode = #tpu.pipeline_mode<synchronous>, transform_indices = @transform_6, window_bounds = array<i64: 32, 32>}, {pipeline_mode = #tpu.pipeline_mode<synchronous>, transform_indices = @transform_7, window_bounds = array<i64: 4, 32>}, {pipeline_mode = #tpu.pipeline_mode<synchronous>, transform_indices = @transform_8, window_bounds = array<i64: 1, 32>}, {pipeline_mode = #tpu.pipeline_mode<synchronous>, transform_indices = @transform_9, window_bounds = array<i64: 1, 32>}, {transform_indices = @transform_10, window_bounds = array<i64: 1, 1>}, {transform_indices = @transform_11, window_bounds = array<i64: 8, 1>}]} {
    %c0 = arith.constant 0 : index
    %c0_0 = arith.constant 0 : index
    %0 = vector.load %arg1[%c0, %c0_0] : memref<8x16xf32, #tpu.memory_space<vmem>>, vector<8x16xf32>
    %c0_1 = arith.constant 0 : index
    %c0_2 = arith.constant 0 : index
    %1 = vector.load %arg2[%c0_1, %c0_2] : memref<8x4xf32, #tpu.memory_space<vmem>>, vector<8x4xf32>
    %c0_3 = arith.constant 0 : index
    %c0_4 = arith.constant 0 : index
    %2 = vector.load %arg3[%c0_3, %c0_4] : memref<16x32xf32, #tpu.memory_space<vmem>>, vector<16x32xf32>
    %cst = arith.constant dense<0.000000e+00> : vector<8x32xf32>
    %3 = tpu.matmul %0, %2, %cst {dimension_numbers = #tpu.dot_dimension_numbers<[1], [0], [0], [1], [0, 0, 1, 1], [], []>} : vector<8x16xf32>, vector<16x32xf32>, vector<8x32xf32> -> vector<8x32xf32>
    %c0_5 = arith.constant 0 : index
    %c0_6 = arith.constant 0 : index
    %4 = vector.load %arg4[%c0_5, %c0_6] : memref<1x32xf32, #tpu.memory_space<vmem>>, vector<1x32xf32>
    %5 = vector.broadcast %4 : vector<1x32xf32> to vector<8x32xf32>
    %6 = arith.addf %3, %5 : vector<8x32xf32>
    %cst_7 = arith.constant 0.000000e+00 : f32
    %7 = vector.broadcast %cst_7 : f32 to vector<8x32xf32>
    %8 = arith.maximumf %6, %7 : vector<8x32xf32>
    %c0_8 = arith.constant 0 : index
    %c0_9 = arith.constant 0 : index
    %9 = vector.load %arg5[%c0_8, %c0_9] : memref<32x32xf32, #tpu.memory_space<vmem>>, vector<32x32xf32>
    %cst_10 = arith.constant dense<0.000000e+00> : vector<8x32xf32>
    %10 = tpu.matmul %8, %9, %cst_10 {dimension_numbers = #tpu.dot_dimension_numbers<[1], [0], [0], [1], [0, 0, 1, 1], [], []>} : vector<8x32xf32>, vector<32x32xf32>, vector<8x32xf32> -> vector<8x32xf32>
    %c0_11 = arith.constant 0 : index
    %c0_12 = arith.constant 0 : index
    %11 = vector.load %arg6[%c0_11, %c0_12] : memref<1x32xf32, #tpu.memory_space<vmem>>, vector<1x32xf32>
    %12 = vector.broadcast %11 : vector<1x32xf32> to vector<8x32xf32>
    %13 = arith.addf %10, %12 : vector<8x32xf32>
    %cst_13 = arith.constant 0.000000e+00 : f32
    %14 = vector.broadcast %cst_13 : f32 to vector<8x32xf32>
    %15 = arith.maximumf %13, %14 : vector<8x32xf32>
    %16 = vector.extract_strided_slice %1 {offsets = [0, 0], sizes = [8, 1], strides = [1, 1]} : vector<8x4xf32> to vector<8x1xf32>
    %c0_14 = arith.constant 0 : index
    %c0_15 = arith.constant 0 : index
    %17 = vector.load %arg8[%c0_14, %c0_15] : memref<4x32xf32, #tpu.memory_space<vmem>>, vector<1x32xf32>
    %18 = vector.broadcast %16 : vector<8x1xf32> to vector<8x32xf32>
    %19 = vector.broadcast %17 : vector<1x32xf32> to vector<8x32xf32>
    %20 = arith.mulf %18, %19 : vector<8x32xf32>
    %21 = vector.extract_strided_slice %1 {offsets = [0, 1], sizes = [8, 1], strides = [1, 1]} : vector<8x4xf32> to vector<8x1xf32>
    %c1 = arith.constant 1 : index
    %c0_16 = arith.constant 0 : index
    %22 = vector.load %arg8[%c1, %c0_16] : memref<4x32xf32, #tpu.memory_space<vmem>>, vector<1x32xf32>
    %23 = vector.broadcast %21 : vector<8x1xf32> to vector<8x32xf32>
    %24 = vector.broadcast %22 : vector<1x32xf32> to vector<8x32xf32>
    %25 = arith.mulf %23, %24 : vector<8x32xf32>
    %26 = arith.addf %20, %25 : vector<8x32xf32>
    %27 = vector.extract_strided_slice %1 {offsets = [0, 2], sizes = [8, 1], strides = [1, 1]} : vector<8x4xf32> to vector<8x1xf32>
    %c2 = arith.constant 2 : index
    %c0_17 = arith.constant 0 : index
    %28 = vector.load %arg8[%c2, %c0_17] : memref<4x32xf32, #tpu.memory_space<vmem>>, vector<1x32xf32>
    %29 = vector.broadcast %27 : vector<8x1xf32> to vector<8x32xf32>
    %30 = vector.broadcast %28 : vector<1x32xf32> to vector<8x32xf32>
    %31 = arith.mulf %29, %30 : vector<8x32xf32>
    %32 = arith.addf %26, %31 : vector<8x32xf32>
    %33 = vector.extract_strided_slice %1 {offsets = [0, 3], sizes = [8, 1], strides = [1, 1]} : vector<8x4xf32> to vector<8x1xf32>
    %c3 = arith.constant 3 : index
    %c0_18 = arith.constant 0 : index
    %34 = vector.load %arg8[%c3, %c0_18] : memref<4x32xf32, #tpu.memory_space<vmem>>, vector<1x32xf32>
    %35 = vector.broadcast %33 : vector<8x1xf32> to vector<8x32xf32>
    %36 = vector.broadcast %34 : vector<1x32xf32> to vector<8x32xf32>
    %37 = arith.mulf %35, %36 : vector<8x32xf32>
    %38 = arith.addf %32, %37 : vector<8x32xf32>
    %c0_19 = arith.constant 0 : index
    %c0_20 = arith.constant 0 : index
    %39 = vector.load %arg7[%c0_19, %c0_20] : memref<32x32xf32, #tpu.memory_space<vmem>>, vector<32x32xf32>
    %cst_21 = arith.constant dense<0.000000e+00> : vector<8x32xf32>
    %40 = tpu.matmul %15, %39, %cst_21 {dimension_numbers = #tpu.dot_dimension_numbers<[1], [0], [0], [1], [0, 0, 1, 1], [], []>} : vector<8x32xf32>, vector<32x32xf32>, vector<8x32xf32> -> vector<8x32xf32>
    %41 = arith.addf %40, %38 : vector<8x32xf32>
    %c0_22 = arith.constant 0 : index
    %c0_23 = arith.constant 0 : index
    %42 = vector.load %arg9[%c0_22, %c0_23] : memref<1x32xf32, #tpu.memory_space<vmem>>, vector<1x32xf32>
    %43 = vector.broadcast %42 : vector<1x32xf32> to vector<8x32xf32>
    %44 = arith.addf %41, %43 : vector<8x32xf32>
    %cst_24 = arith.constant 0.000000e+00 : f32
    %45 = vector.broadcast %cst_24 : f32 to vector<8x32xf32>
    %46 = arith.maximumf %44, %45 : vector<8x32xf32>
    %c0_25 = arith.constant 0 : index
    %c0_26 = arith.constant 0 : index
    %47 = vector.load %arg10[%c0_25, %c0_26] : memref<1x32xf32, #tpu.memory_space<vmem>>, vector<1x32xf32>
    %48 = vector.broadcast %47 : vector<1x32xf32> to vector<8x32xf32>
    %49 = arith.mulf %46, %48 : vector<8x32xf32>
    %cst_27 = arith.constant dense<0.000000e+00> : vector<8xf32>
    %50 = vector.multi_reduction <add>, %49, %cst_27 [1] : vector<8x32xf32> to vector<8xf32>
    %51 = vector.shape_cast %50 : vector<8xf32> to vector<8x1xf32>
    %c0_28 = arith.constant 0 : index
    %c0_29 = arith.constant 0 : index
    %52 = memref.load %arg11[%c0_28, %c0_29] : memref<1x1xf32, #tpu.memory_space<smem>>
    %53 = vector.broadcast %52 : f32 to vector<8x1xf32>
    %54 = arith.addf %51, %53 : vector<8x1xf32>
    %c0_30 = arith.constant 0 : index
    %c0_31 = arith.constant 0 : index
    %55 = vector.load %arg12[%c0_30, %c0_31] : memref<8x1xf32, #tpu.memory_space<vmem>>, vector<8x1xf32>
    tpu.vector_store %arg12[%c0_30, %c0_31], %54 {strides = array<i32>} : memref<8x1xf32, #tpu.memory_space<vmem>>, vector<8x1xf32>,
    return
  }
  func.func @transform_0(%arg0: i32) -> (i32, i32) {
    %c0_i32 = arith.constant 0 : i32
    %c0_i32_0 = arith.constant 0 : i32
    return %arg0, %c0_i32 : i32, i32
  }
  func.func @transform_1(%arg0: i32) -> (i32, i32) {
    %c0_i32 = arith.constant 0 : i32
    %c0_i32_0 = arith.constant 0 : i32
    return %arg0, %c0_i32 : i32, i32
  }
  func.func @transform_2(%arg0: i32) -> (i32, i32) {
    %c0_i32 = arith.constant 0 : i32
    %c0_i32_0 = arith.constant 0 : i32
    %c0_i32_1 = arith.constant 0 : i32
    return %c0_i32, %c0_i32_0 : i32, i32
  }
  func.func @transform_3(%arg0: i32) -> (i32, i32) {
    %c0_i32 = arith.constant 0 : i32
    %c0_i32_0 = arith.constant 0 : i32
    %c0_i32_1 = arith.constant 0 : i32
    return %c0_i32, %c0_i32_0 : i32, i32
  }
  func.func @transform_4(%arg0: i32) -> (i32, i32) {
    %c0_i32 = arith.constant 0 : i32
    %c0_i32_0 = arith.constant 0 : i32
    %c0_i32_1 = arith.constant 0 : i32
    return %c0_i32, %c0_i32_0 : i32, i32
  }
  func.func @transform_5(%arg0: i32) -> (i32, i32) {
    %c0_i32 = arith.constant 0 : i32
    %c0_i32_0 = arith.constant 0 : i32
    %c0_i32_1 = arith.constant 0 : i32
    return %c0_i32, %c0_i32_0 : i32, i32
  }
  func.func @transform_6(%arg0: i32) -> (i32, i32) {
    %c0_i32 = arith.constant 0 : i32
    %c0_i32_0 = arith.constant 0 : i32
    %c0_i32_1 = arith.constant 0 : i32
    return %c0_i32, %c0_i32_0 : i32, i32
  }
  func.func @transform_7(%arg0: i32) -> (i32, i32) {
    %c0_i32 = arith.constant 0 : i32
    %c0_i32_0 = arith.constant 0 : i32
    %c0_i32_1 = arith.constant 0 : i32
    return %c0_i32, %c0_i32_0 : i32, i32
  }
  func.func @transform_8(%arg0: i32) -> (i32, i32) {
    %c0_i32 = arith.constant 0 : i32
    %c0_i32_0 = arith.constant 0 : i32
    %c0_i32_1 = arith.constant 0 : i32
    return %c0_i32, %c0_i32_0 : i32, i32
  }
  func.func @transform_9(%arg0: i32) -> (i32, i32) {
    %c0_i32 = arith.constant 0 : i32
    %c0_i32_0 = arith.constant 0 : i32
    %c0_i32_1 = arith.constant 0 : i32
    return %c0_i32, %c0_i32_0 : i32, i32
  }
  func.func @transform_10(%arg0: i32) -> (i32, i32) {
    %c0_i32 = arith.constant 0 : i32
    %c0_i32_0 = arith.constant 0 : i32
    %c0_i32_1 = arith.constant 0 : i32
    return %c0_i32, %c0_i32_0 : i32, i32
  }
  func.func @transform_11(%arg0: i32) -> (i32, i32) {
    %c0_i32 = arith.constant 0 : i32
    %c0_i32_0 = arith.constant 0 : i32
    return %arg0, %c0_i32 : i32, i32
  }
}

</mosaic_0001>

<llo_original>
// kernel: tpu_custom_call.1
$region0: #{tpu_custom_call.1}
  #allocation0 [shape = 'u32[]', space=smem, size = 0x4, offset = 0x4, fixed_abs, tag = 'smem constant byte address 0x4 - core index']
  #allocation1 [shape = 'u32[144,128]{1,0:T(1,128)}', space=vmem, size = 0x12000, scoped, tag = 'internal scratch']
  #allocation2 [shape = 'f32[1,1]{1,0:T(1,128)S(6)}', space=smem, size = 0x200, scoped, tag = 'scoped memory for tpu_custom_call.1']
  %s0 = inlined_call_operand.hbm [shape: f32[8,16], index: 0, kind: input, shape index: {}]
  %s1 = inlined_call_operand.vmem [shape: f32[8,4], index: 1, kind: input, shape index: {}]
  %s2 = inlined_call_operand.hbm [shape: f32[16,32], index: 2, kind: input, shape index: {}]
  %s3 = inlined_call_operand.vmem [shape: f32[1,32], index: 3, kind: input, shape index: {}]
  %s4 = inlined_call_operand.hbm [shape: f32[32,32], index: 4, kind: input, shape index: {}]
  %s5 = inlined_call_operand.vmem [shape: f32[1,32], index: 5, kind: input, shape index: {}]
  %s6 = inlined_call_operand.vmem [shape: f32[32,32], index: 6, kind: input, shape index: {}]
  %s7 = inlined_call_operand.vmem [shape: f32[4,32], index: 7, kind: input, shape index: {}]
  %s8 = inlined_call_operand.vmem [shape: f32[1,32], index: 8, kind: input, shape index: {}]
  %s9 = inlined_call_operand.vmem [shape: f32[1,32], index: 9, kind: input, shape index: {}]
  %s10 = inlined_call_operand.<no memory space> [shape: f32[1,1], index: 10, kind: input, shape index: {}]
  %s11 = inlined_call_operand.vmem [shape: f32[8,1], index: 11, kind: output, shape index: {}]
  %s12 = sld [smem:[#allocation0]]
  $region66: #{tpu_custom_call.1} parent=0
    _
  %s14 = ssub.s32 1, %s12
  %s15 = scalar_select 0, %s14, %s12
  %16 = sst [smem:[#allocation2]] %s10
  $region1: #{tpu_custom_call.1} parent=0
    #allocation3 [shape = 'u8[4096]{0}', space=vmem, size = 0x1000, scoped, tag = 'input window, operand 0, single buffered']
    #allocation4 [shape = 's32[1]{0}', space=sflag, size = 0x4, scoped, tag = 'scoped memory for tpu_custom_call.1']
    #allocation5 [shape = 'u8[8192]{0}', space=vmem, size = 0x2000, scoped, tag = 'input window, operand 2, single buffered']
    #allocation6 [shape = 's32[1]{0}', space=sflag, size = 0x4, scoped, tag = 'scoped memory for tpu_custom_call.1']
    #allocation7 [shape = 'u8[16384]{0}', space=vmem, size = 0x4000, scoped, tag = 'input window, operand 4, single buffered']
    %17 = vsyncpa [#allocation4], 0
    %18 = vsyncpa [#allocation6], 0
    // Predicated region
    $region2: #{tpu_custom_call.1} parent=1 // pred_check
      _
    $region3: #{tpu_custom_call.1} parent=1 // pred_check_branch
      %20 = sbr.rel (0) target = $region5
    $region4: #{tpu_custom_call.1} parent=1 // pred_region
      %s22 = ssub.s32 128, 128
      %23 = vsyncadd [#allocation4], %s22
      %s25 = sshll.u32 [#allocation3], 4
      %s26 = int_to_ptr.vmem [resolvable:$true] %s25
      %28 = dma.hbm_to_vmem [thread:$0]  %s0, 128, %s26, [#allocation4]
    $region5: #{tpu_custom_call.1} parent=1 // pred_fallthru
      _
    // Predicated region
    $region6: #{tpu_custom_call.1} parent=1 // pred_check
      _
    $region7: #{tpu_custom_call.1} parent=1 // pred_check_branch
      %30 = sbr.rel (0) target = $region9
    $region8: #{tpu_custom_call.1} parent=1 // pred_region
      _
    $region9: #{tpu_custom_call.1} parent=1 // pred_fallthru
      _
    // Predicated region
    $region10: #{tpu_custom_call.1} parent=1 // pred_check
      _
    $region11: #{tpu_custom_call.1} parent=1 // pred_check_branch
      %32 = sbr.rel (0) target = $region13
    $region12: #{tpu_custom_call.1} parent=1 // pred_region
      %s34 = ssub.s32 256, 256
      %35 = vsyncadd [#allocation6], %s34
      %s36 = sshll.u32 [#allocation5], 4
      %s37 = int_to_ptr.vmem [resolvable:$true] %s36
      %42 = dma.hbm_to_vmem [thread:$0]  %s2, 256, %s37, [#allocation6], 128, 128, 8
    $region13: #{tpu_custom_call.1} parent=1 // pred_fallthru
      _
    // Predicated region
    $region14: #{tpu_custom_call.1} parent=1 // pred_check
      _
    $region15: #{tpu_custom_call.1} parent=1 // pred_check_branch
      %44 = sbr.rel (0) target = $region17
    $region16: #{tpu_custom_call.1} parent=1 // pred_region
      _
    $region17: #{tpu_custom_call.1} parent=1 // pred_fallthru
      _
    // Predicated region
    $region18: #{tpu_custom_call.1} parent=1 // pred_check
      _
    $region19: #{tpu_custom_call.1} parent=1 // pred_check_branch
      %46 = sbr.rel (0) target = $region21
    $region20: #{tpu_custom_call.1} parent=1 // pred_region
      %s48 = ssub.s32 512, 512
      %49 = vsyncadd [#allocation6], %s48
      %s50 = sshll.u32 [#allocation7], 4
      %s51 = int_to_ptr.vmem [resolvable:$true] %s50
      %56 = dma.hbm_to_vmem [thread:$0]  %s4, 512, %s51, [#allocation6], 128, 128, 8
    $region21: #{tpu_custom_call.1} parent=1 // pred_fallthru
      _
    // Predicated region
    $region22: #{tpu_custom_call.1} parent=1 // pred_check
      _
    $region23: #{tpu_custom_call.1} parent=1 // pred_check_branch
      %58 = sbr.rel (0) target = $region25
    $region24: #{tpu_custom_call.1} parent=1 // pred_region
      _
    $region25: #{tpu_custom_call.1} parent=1 // pred_fallthru
      _
    // Predicated region
    $region26: #{tpu_custom_call.1} parent=1 // pred_check
      _
    $region27: #{tpu_custom_call.1} parent=1 // pred_check_branch
      %60 = sbr.rel (0) target = $region29
    $region28: #{tpu_custom_call.1} parent=1 // pred_region
      _
    $region29: #{tpu_custom_call.1} parent=1 // pred_fallthru
      _
    // Predicated region
    $region30: #{tpu_custom_call.1} parent=1 // pred_check
      _
    $region31: #{tpu_custom_call.1} parent=1 // pred_check_branch
      %62 = sbr.rel (0) target = $region33
    $region32: #{tpu_custom_call.1} parent=1 // pred_region
      _
    $region33: #{tpu_custom_call.1} parent=1 // pred_fallthru
      _
    // Predicated region
    $region34: #{tpu_custom_call.1} parent=1 // pred_check
      _
    $region35: #{tpu_custom_call.1} parent=1 // pred_check_branch
      %64 = sbr.rel (0) target = $region37
    $region36: #{tpu_custom_call.1} parent=1 // pred_region
      _
    $region37: #{tpu_custom_call.1} parent=1 // pred_fallthru
      _
    // Predicated region
    $region38: #{tpu_custom_call.1} parent=1 // pred_check
      _
    $region39: #{tpu_custom_call.1} parent=1 // pred_check_branch
      %66 = sbr.rel (0) target = $region41
    $region40: #{tpu_custom_call.1} parent=1 // pred_region
      _
    $region41: #{tpu_custom_call.1} parent=1 // pred_fallthru
      _
    // Predicated region
    $region42: #{tpu_custom_call.1} parent=1 // pred_check
      _
    $region43: #{tpu_custom_call.1} parent=1 // pred_check_branch
      %68 = sbr.rel (0) target = $region45
    $region44: #{tpu_custom_call.1} parent=1 // pred_region
      _
    $region45: #{tpu_custom_call.1} parent=1 // pred_fallthru
      _
    // Predicated region
    $region46: #{tpu_custom_call.1} parent=1 // pred_check
      _
    $region47: #{tpu_custom_call.1} parent=1 // pred_check_branch
      %70 = sbr.rel (0) target = $region49
    $region48: #{tpu_custom_call.1} parent=1 // pred_region
      %71 = dma.done [#allocation4], 128
    $region49: #{tpu_custom_call.1} parent=1 // pred_fallthru
      _
    // Predicated region
    $region50: #{tpu_custom_call.1} parent=1 // pred_check
      _
    $region51: #{tpu_custom_call.1} parent=1 // pred_check_branch
      %73 = sbr.rel (0) target = $region53
    $region52: #{tpu_custom_call.1} parent=1 // pred_region
      %74 = dma.done [#allocation6], 256
    $region53: #{tpu_custom_call.1} parent=1 // pred_fallthru
      _
    // Predicated region
    $region54: #{tpu_custom_call.1} parent=1 // pred_check
      _
    $region55: #{tpu_custom_call.1} parent=1 // pred_check_branch
      %76 = sbr.rel (0) target = $region57
    $region56: #{tpu_custom_call.1} parent=1 // pred_region
      %77 = dma.done [#allocation6], 512
    $region57: #{tpu_custom_call.1} parent=1 // pred_fallthru
      _
    %v78 = vld [vmem:[#allocation3] sm:$0xff]
    %v79 = vld [vmem:[%s1] sm:$0xff]
    %v80 = vld [vmem:[#allocation5] sm:$0xff]
    %v81 = vld [vmem:[#allocation5 + $0x8] sm:$0xff]
    %v82 = vld [vmem:[%s3] sm:$0x1]
    %v84 = vlaneseq
    %v85 = vshrl.u32 %v84, 7
    %v86 = vsub.s32 0, %v85
    %v87 = vrot.slane %v82, %v86
    %vm89 = vcmask 130048
    %v91 = vsel %vm89, %v78, 0
    %93 = vmatprep.subr.mxu0 0.0
    %94 = vmatpush1.msra.mxu0 %v80
    %95 = vmatprep.subr.mxu0 0.0
    %96 = vmatpush1.msra.mxu0 %v81
    %97 = vmatprep.subr.mxu0 0.0
    %98 = vmatpush1.msra.mxu0 0.0
    %99 = vmatprep.subr.mxu0 0.0
    %100 = vmatpush1.msra.mxu0 0.0
    %101 = vmatprep.subr.mxu0 0.0
    %102 = vmatpush1.msra.mxu0 0.0
    %103 = vmatprep.subr.mxu0 0.0
    %104 = vmatpush1.msra.mxu0 0.0
    %105 = vmatprep.subr.mxu0 0.0
    %106 = vmatpush1.msra.mxu0 0.0
    %107 = vmatprep.subr.mxu0 0.0
    %108 = vmatpush1.msra.mxu0 0.0
    %109 = vmatprep.subr.mxu0 0.0
    %110 = vmatpush1.msra.mxu0 0.0
    %111 = vmatprep.subr.mxu0 0.0
    %112 = vmatpush1.msra.mxu0 0.0
    %113 = vmatprep.subr.mxu0 0.0
    %114 = vmatpush1.msra.mxu0 0.0
    %115 = vmatprep.subr.mxu0 0.0
    %116 = vmatpush1.msra.mxu0 0.0
    %117 = vmatprep.subr.mxu0 0.0
    %118 = vmatpush1.msra.mxu0 0.0
    %119 = vmatprep.subr.mxu0 0.0
    %120 = vmatpush1.msra.mxu0 0.0
    %121 = vmatprep.subr.mxu0 0.0
    %122 = vmatpush1.msra.mxu0 0.0
    %123 = vmatprep.subr.mxu0 0.0
    %124 = vmatpush1.msra.mxu0 0.0
    %125 = vmatprep.subr.mxu0 0.0
    %126 = vmatpush1.msra.mxu0 0.0
    %127 = vmatprep.subr.mxu0 0.0
    %128 = vmatpush1.msra.mxu0 0.0
    %129 = vmatprep.subr.mxu0 0.0
    %130 = vmatpush1.msra.mxu0 0.0
    %131 = vmatprep.subr.mxu0 0.0
    %132 = vmatpush1.msra.mxu0 0.0
    %133 = vmatprep.subr.mxu0 0.0
    %134 = vmatpush1.msra.mxu0 0.0
    %135 = vmatprep.subr.mxu0 0.0
    %136 = vmatpush1.msra.mxu0 0.0
    %137 = vmatprep.subr.mxu0 0.0
    %138 = vmatpush1.msra.mxu0 0.0
    %139 = vmatprep.subr.mxu0 0.0
    %140 = vmatpush1.msra.mxu0 0.0
    %141 = vmatprep.subr.mxu0 0.0
    %142 = vmatpush1.msra.mxu0 0.0
    %143 = vmatprep.subr.mxu0 0.0
    %144 = vmatpush1.msra.mxu0 0.0
    %145 = vmatprep.subr.mxu0 0.0
    %146 = vmatpush1.msra.mxu0 0.0
    %147 = vmatprep.subr.mxu0 0.0
    %148 = vmatpush1.msra.mxu0 0.0
    %149 = vmatprep.subr.mxu0 0.0
    %150 = vmatpush1.msra.mxu0 0.0
    %151 = vmatprep.subr.mxu0 0.0
    %152 = vmatpush1.msra.mxu0 0.0
    %153 = vmatprep.subr.mxu0 0.0
    %154 = vmatpush1.msra.mxu0 0.0
    %155 = vmatprep.subr.mxu0 0.0
    %156 = vmatpush1.msra.mxu0 0.0
    %157 = vmatprep.mubr.f32.mxu0 0.0
    %158 = vmatmul.mubr.f32.gmra.mrb[0].mxu0 %v91
    %v159 = vpop.f32.mrb[0].mxu0
    %v160 = vadd.f32 %v87, %v159
    %v161 = vpop.f32.mrb[0].mxu0
    %162 = vdwg.mxu0
    %v163 = vmax.f32 %v160, 0.0
    %v164 = vld [vmem:[#allocation7] sm:$0xff]
    %v165 = vld [vmem:[#allocation7 + $0x8] sm:$0xff]
    %v166 = vld [vmem:[#allocation7 + $0x10] sm:$0xff]
    %v167 = vld [vmem:[#allocation7 + $0x18] sm:$0xff]
    %v168 = vld [vmem:[%s5] sm:$0x1]
    %v170 = vlaneseq
    %v171 = vshrl.u32 %v170, 7
    %v172 = vsub.s32 0, %v171
    %v173 = vrot.slane %v168, %v172
    %vm175 = vcmask 261120
    %v177 = vsel %vm175, %v163, 0
    %179 = vmatprep.subr.mxu0 0.0
    %180 = vmatpush1.msra.mxu0 %v164
    %181 = vmatprep.subr.mxu0 0.0
    %182 = vmatpush1.msra.mxu0 %v165
    %183 = vmatprep.subr.mxu0 0.0
    %184 = vmatpush1.msra.mxu0 %v166
    %185 = vmatprep.subr.mxu0 0.0
    %186 = vmatpush1.msra.mxu0 %v167
    %187 = vmatprep.subr.mxu0 0.0
    %188 = vmatpush1.msra.mxu0 0.0
    %189 = vmatprep.subr.mxu0 0.0
    %190 = vmatpush1.msra.mxu0 0.0
    %191 = vmatprep.subr.mxu0 0.0
    %192 = vmatpush1.msra.mxu0 0.0
    %193 = vmatprep.subr.mxu0 0.0
    %194 = vmatpush1.msra.mxu0 0.0
    %195 = vmatprep.subr.mxu0 0.0
    %196 = vmatpush1.msra.mxu0 0.0
    %197 = vmatprep.subr.mxu0 0.0
    %198 = vmatpush1.msra.mxu0 0.0
    %199 = vmatprep.subr.mxu0 0.0
    %200 = vmatpush1.msra.mxu0 0.0
    %201 = vmatprep.subr.mxu0 0.0
    %202 = vmatpush1.msra.mxu0 0.0
    %203 = vmatprep.subr.mxu0 0.0
    %204 = vmatpush1.msra.mxu0 0.0
    %205 = vmatprep.subr.mxu0 0.0
    %206 = vmatpush1.msra.mxu0 0.0
    %207 = vmatprep.subr.mxu0 0.0
    %208 = vmatpush1.msra.mxu0 0.0
    %209 = vmatprep.subr.mxu0 0.0
    %210 = vmatpush1.msra.mxu0 0.0
    %211 = vmatprep.subr.mxu0 0.0
    %212 = vmatpush1.msra.mxu0 0.0
    %213 = vmatprep.subr.mxu0 0.0
    %214 = vmatpush1.msra.mxu0 0.0
    %215 = vmatprep.subr.mxu0 0.0
    %216 = vmatpush1.msra.mxu0 0.0
    %217 = vmatprep.subr.mxu0 0.0
    %218 = vmatpush1.msra.mxu0 0.0
    %219 = vmatprep.subr.mxu0 0.0
    %220 = vmatpush1.msra.mxu0 0.0
    %221 = vmatprep.subr.mxu0 0.0
    %222 = vmatpush1.msra.mxu0 0.0
    %223 = vmatprep.subr.mxu0 0.0
    %224 = vmatpush1.msra.mxu0 0.0
    %225 = vmatprep.subr.mxu0 0.0
    %226 = vmatpush1.msra.mxu0 0.0
    %227 = vmatprep.subr.mxu0 0.0
    %228 = vmatpush1.msra.mxu0 0.0
    %229 = vmatprep.subr.mxu0 0.0
    %230 = vmatpush1.msra.mxu0 0.0
    %231 = vmatprep.subr.mxu0 0.0
    %232 = vmatpush1.msra.mxu0 0.0
    %233 = vmatprep.subr.mxu0 0.0
    %234 = vmatpush1.msra.mxu0 0.0
    %235 = vmatprep.subr.mxu0 0.0
    %236 = vmatpush1.msra.mxu0 0.0
    %237 = vmatprep.subr.mxu0 0.0
    %238 = vmatpush1.msra.mxu0 0.0
    %239 = vmatprep.subr.mxu0 0.0
    %240 = vmatpush1.msra.mxu0 0.0
    %241 = vmatprep.subr.mxu0 0.0
    %242 = vmatpush1.msra.mxu0 0.0
    %243 = vmatprep.mubr.f32.mxu0 0.0
    %244 = vmatmul.mubr.f32.gmra.mrb[0].mxu0 %v177
    %v245 = vpop.f32.mrb[0].mxu0
    %v246 = vadd.f32 %v173, %v245
    %v247 = vpop.f32.mrb[0].mxu0
    %248 = vdwg.mxu0
    %v249 = vmax.f32 %v246, 0.0
    %v250 = vld [vmem:[%s7] sm:$0x1]
    %252 = vset.pattern.permute.xlu0 0
    %253 = vperm.xlu0 %252, %v79
    %v254 = vpop.permute.xlu0 %253
    %v256 = vlaneseq
    %v257 = vshrl.u32 %v256, 7
    %v258 = vsub.s32 0, %v257
    %v259 = vrot.slane %v250, %v258
    %v260 = vmul.f32 %v254, %v259
    %v261 = vld [vmem:[%s7 + $0x1] sm:$0x1]
    %262 = vset.pattern.permute.xlu0 1
    %263 = vperm.xlu0 %262, %v79
    %v264 = vpop.permute.xlu0 %263
    %v266 = vlaneseq
    %v267 = vshrl.u32 %v266, 7
    %v268 = vsub.s32 0, %v267
    %v269 = vrot.slane %v261, %v268
    %v270 = vmul.f32 %v264, %v269
    %v271 = vadd.f32 %v260, %v270
    %v272 = vld [vmem:[%s7 + $0x2] sm:$0x1]
    %273 = vset.pattern.permute.xlu0 2
    %274 = vperm.xlu0 %273, %v79
    %v275 = vpop.permute.xlu0 %274
    %v277 = vlaneseq
    %v278 = vshrl.u32 %v277, 7
    %v279 = vsub.s32 0, %v278
    %v280 = vrot.slane %v272, %v279
    %v281 = vmul.f32 %v275, %v280
    %v282 = vadd.f32 %v271, %v281
    %v283 = vld [vmem:[%s7 + $0x3] sm:$0x1]
    %284 = vset.pattern.permute.xlu0 3
    %285 = vperm.xlu0 %284, %v79
    %v286 = vpop.permute.xlu0 %285
    %v288 = vlaneseq
    %v289 = vshrl.u32 %v288, 7
    %v290 = vsub.s32 0, %v289
    %v291 = vrot.slane %v283, %v290
    %v292 = vmul.f32 %v286, %v291
    %v293 = vadd.f32 %v282, %v292
    %v294 = vld [vmem:[%s6] sm:$0xff]
    %v295 = vld [vmem:[%s6 + $0x8] sm:$0xff]
    %v296 = vld [vmem:[%s6 + $0x10] sm:$0xff]
    %v297 = vld [vmem:[%s6 + $0x18] sm:$0xff]
    %v299 = vsel %vm175, %v249, 0
    %301 = vmatprep.subr.mxu0 0.0
    %302 = vmatpush1.msra.mxu0 %v294
    %303 = vmatprep.subr.mxu0 0.0
    %304 = vmatpush1.msra.mxu0 %v295
    %305 = vmatprep.subr.mxu0 0.0
    %306 = vmatpush1.msra.mxu0 %v296
    %307 = vmatprep.subr.mxu0 0.0
    %308 = vmatpush1.msra.mxu0 %v297
    %309 = vmatprep.subr.mxu0 0.0
    %310 = vmatpush1.msra.mxu0 0.0
    %311 = vmatprep.subr.mxu0 0.0
    %312 = vmatpush1.msra.mxu0 0.0
    %313 = vmatprep.subr.mxu0 0.0
    %314 = vmatpush1.msra.mxu0 0.0
    %315 = vmatprep.subr.mxu0 0.0
    %316 = vmatpush1.msra.mxu0 0.0
    %317 = vmatprep.subr.mxu0 0.0
    %318 = vmatpush1.msra.mxu0 0.0
    %319 = vmatprep.subr.mxu0 0.0
    %320 = vmatpush1.msra.mxu0 0.0
    %321 = vmatprep.subr.mxu0 0.0
    %322 = vmatpush1.msra.mxu0 0.0
    %323 = vmatprep.subr.mxu0 0.0
    %324 = vmatpush1.msra.mxu0 0.0
    %325 = vmatprep.subr.mxu0 0.0
    %326 = vmatpush1.msra.mxu0 0.0
    %327 = vmatprep.subr.mxu0 0.0
    %328 = vmatpush1.msra.mxu0 0.0
    %329 = vmatprep.subr.mxu0 0.0
    %330 = vmatpush1.msra.mxu0 0.0
    %331 = vmatprep.subr.mxu0 0.0
    %332 = vmatpush1.msra.mxu0 0.0
    %333 = vmatprep.subr.mxu0 0.0
    %334 = vmatpush1.msra.mxu0 0.0
    %335 = vmatprep.subr.mxu0 0.0
    %336 = vmatpush1.msra.mxu0 0.0
    %337 = vmatprep.subr.mxu0 0.0
    %338 = vmatpush1.msra.mxu0 0.0
    %339 = vmatprep.subr.mxu0 0.0
    %340 = vmatpush1.msra.mxu0 0.0
    %341 = vmatprep.subr.mxu0 0.0
    %342 = vmatpush1.msra.mxu0 0.0
    %343 = vmatprep.subr.mxu0 0.0
    %344 = vmatpush1.msra.mxu0 0.0
    %345 = vmatprep.subr.mxu0 0.0
    %346 = vmatpush1.msra.mxu0 0.0
    %347 = vmatprep.subr.mxu0 0.0
    %348 = vmatpush1.msra.mxu0 0.0
    %349 = vmatprep.subr.mxu0 0.0
    %350 = vmatpush1.msra.mxu0 0.0
    %351 = vmatprep.subr.mxu0 0.0
    %352 = vmatpush1.msra.mxu0 0.0
    %353 = vmatprep.subr.mxu0 0.0
    %354 = vmatpush1.msra.mxu0 0.0
    %355 = vmatprep.subr.mxu0 0.0
    %356 = vmatpush1.msra.mxu0 0.0
    %357 = vmatprep.subr.mxu0 0.0
    %358 = vmatpush1.msra.mxu0 0.0
    %359 = vmatprep.subr.mxu0 0.0
    %360 = vmatpush1.msra.mxu0 0.0
    %361 = vmatprep.subr.mxu0 0.0
    %362 = vmatpush1.msra.mxu0 0.0
    %363 = vmatprep.subr.mxu0 0.0
    %364 = vmatpush1.msra.mxu0 0.0
    %365 = vmatprep.mubr.f32.mxu0 0.0
    %366 = vmatmul.mubr.f32.gmra.mrb[0].mxu0 %v299
    %v367 = vpop.f32.mrb[0].mxu0
    %v368 = vadd.f32 %v293, %v367
    %v369 = vpop.f32.mrb[0].mxu0
    %370 = vdwg.mxu0
    %v371 = vld [vmem:[%s8] sm:$0x1]
    %v373 = vlaneseq
    %v374 = vshrl.u32 %v373, 7
    %v375 = vsub.s32 0, %v374
    %v376 = vrot.slane %v371, %v375
    %v378 = vadd.f32 %v368, %v376
    %v379 = vmax.f32 %v378, 0.0
    %v380 = vld [vmem:[%s9] sm:$0x1]
    %v382 = vlaneseq
    %v383 = vshrl.u32 %v382, 7
    %v384 = vsub.s32 0, %v383
    %v385 = vrot.slane %v380, %v384
    %v387 = vmul.f32 %v379, %v385
    %v388 = vsel %vm175, %v387, 0.0
    %389 = vadd.xlane.f32.xlu0 %v388
    %v390 = vpop.xlane.xlu0 %389
    %s391 = sld [smem:[#allocation2]]
    %v392 = vstv %s391
    %v393 = vadd.f32 %v390, %v392
    %vm394 = vcmask 7168
    %395 = vst.msk [vmem:[%s11] sm:$0xff] %vm394, %v393
    // Predicated region
    $region58: #{tpu_custom_call.1} parent=1 // pred_check
      _
    $region59: #{tpu_custom_call.1} parent=1 // pred_check_branch
      %397 = sbr.rel (0) target = $region61
    $region60: #{tpu_custom_call.1} parent=1 // pred_region
      _
    $region61: #{tpu_custom_call.1} parent=1 // pred_fallthru
      _
    // Predicated region
    $region62: #{tpu_custom_call.1} parent=1 // pred_check
      _
    $region63: #{tpu_custom_call.1} parent=1 // pred_check_branch
      %399 = sbr.rel (0) target = $region65
    $region64: #{tpu_custom_call.1} parent=1 // pred_region
      _
    $region65: #{tpu_custom_call.1} parent=1 // pred_fallthru
      _
    %400 = vsyncpa [#allocation4], 1
    %401 = vsyncpa [#allocation6], 1

</llo_original>
